<compile_context>
chip_gen: v7x
topology: tpu7x:2x2x1
jax: 0.10.0
libtpu: 0.0.40
codegen_flags: <defaults>
</compile_context>

<pallas_src>
import jax
import jax.numpy as jnp
from jax.experimental import pallas as pl
from jax.experimental.pallas import tpu as pltpu

_LANE = 128      # lane width (last dim)
_SUBLANE = 8     # sublane width (second-to-last dim)


def _round_up(n, m):
    return ((n + m - 1) // m) * m


def _vmem_budget_bytes():
    """~80% of physical VMEM (v5e/v6e: 128 MiB, v7x: 64 MiB per TC)."""
    try:
        cap = int(pltpu.get_tpu_info().vmem_capacity_bytes)
    except Exception:
        cap = 64 << 20          # conservative fallback (v7x per-TC size)
    return int(cap * 0.8)


def _choose_tile_b(batch, padded_dims, weight_bytes, budget):
    """Largest batch tile that fits VMEM, MXU-aligned, with small tail waste."""
    b8 = _round_up(batch, _SUBLANE)
    k1_pad = padded_dims[0]
    n_last_pad = padded_dims[-1]
    max_n_pad = max(padded_dims[1:])
    # Per-row activation bytes: double-buffered bf16 input block, double-
    # buffered fp32 output block, fp32 hidden/accumulator + bf16 recast slack.
    per_row = (2 * 2 * k1_pad) + (2 * 4 * n_last_pad) + (3 * 4 * max_n_pad)
    avail = max(budget - weight_bytes - (2 << 20), per_row * _SUBLANE)
    max_rows = max(_SUBLANE, min(int(avail // per_row), 1024))
    max_rows -= max_rows % _SUBLANE

    if b8 <= max_rows:
        if b8 >= 512:
            # >=2 grid steps so the "parallel" axis shards across v7x's 2 TCs
            # (near-zero tail padding; each step is still >=256 rows).
            return _round_up(pl.cdiv(b8, 2), _SUBLANE)
        return b8

    # Batch spans multiple tiles: largest MXU-aligned tile within the budget
    # (256-row multiples feed the v6e/v7x 256-wide MXU; 128 on v5e is enough),
    # then shrink so the last block is not mostly zero padding.
    mult = 256 if max_rows >= 256 else (128 if max_rows >= 128 else _SUBLANE)
    tile0 = (max_rows // mult) * mult
    n_steps = pl.cdiv(b8, tile0)
    return _round_up(pl.cdiv(b8, n_steps), mult)


def _make_ffn_kernel(n_layers):
    """Fused kernel body for a stack of `n_layers` Linear layers."""

    def kernel(*refs):
        x_ref = refs[0]
        o_ref = refs[-1]
        wb_refs = refs[1:-1]                          # w1, b1, w2, b2, ...
        h = x_ref[...]                                # bf16 [TILE_B, K1_pad]
        for i in range(n_layers):
            w_ref = wb_refs[2 * i]                    # bf16 [K_pad, N_pad]
            b_ref = wb_refs[2 * i + 1]                # fp32 [1, N_pad]
            acc = jnp.dot(h, w_ref[...],
                          preferred_element_type=jnp.float32)   # MXU, fp32 acc
            h = acc + b_ref[...]                      # fp32 bias add (VPU)
            if i + 1 < n_layers:
                h = h.astype(jnp.bfloat16)            # next MXU input
        o_ref[...] = h.astype(o_ref.dtype)

    return kernel


def fused_ffn(x, padded_weights, padded_biases, out_features, *, tile_b=None):
    """logits = Ln(...L2(L1(x))) in one pallas_call.

    x:              [batch, in_features] fp32 (unpadded)
    padded_weights: list of bf16 [K_pad, N_pad] (lane-padded, zero-filled)
    padded_biases:  list of fp32 [1, N_pad]     (lane-padded, zero-filled)
    """
    batch, in_features = x.shape
    n_layers = len(padded_weights)
    k1_pad = padded_weights[0].shape[0]
    n_pads = [w.shape[1] for w in padded_weights]
    n_last_pad = n_pads[-1]

    flat_wb = []
    for w, b in zip(padded_weights, padded_biases):
        flat_wb.extend((w, b))
    wb_bytes = sum(int(a.size) * a.dtype.itemsize for a in flat_wb)

    budget = _vmem_budget_bytes()
    # TODO(synk): stream weights (extra K/N grid axis or pltpu.emit_pipeline)
    # instead of keeping them fully resident when wb_bytes alone exceeds the
    # VMEM budget (very large layers, especially on v7x's 64 MiB VMEM).

    if tile_b is None:
        tile_b = _choose_tile_b(batch, [k1_pad] + n_pads, wb_bytes, budget)
    tile_b = max(_SUBLANE, _round_up(int(tile_b), _SUBLANE))
    b_pad = _round_up(max(batch, tile_b), tile_b)

    # bf16 input: halves input DMA bytes, drops the in-kernel first-layer cast;
    # zero padding (batch + features) is exact and sliced off below.
    x_pad = (jnp.zeros((b_pad, k1_pad), jnp.bfloat16)
             .at[:batch, :in_features].set(x.astype(jnp.bfloat16)))

    grid = (b_pad // tile_b,)
    out_specs = pl.BlockSpec((tile_b, n_last_pad), lambda i: (i, 0))

    def build_in_specs(single_buffer_weights):
        kwargs = {}
        if single_buffer_weights and hasattr(pl, "Buffered"):
            # Resident operands are never re-fetched: one buffer is enough.
            kwargs = dict(pipeline_mode=pl.Buffered(buffer_count=1))
        specs = [pl.BlockSpec((tile_b, k1_pad), lambda i: (i, 0))]
        for w, b in zip(padded_weights, padded_biases):
            specs.append(pl.BlockSpec(w.shape, lambda i: (0, 0), **kwargs))
            specs.append(pl.BlockSpec(b.shape, lambda i: (0, 0), **kwargs))
        return specs

    flops = 2 * b_pad * sum(w.shape[0] * w.shape[1] for w in padded_weights)
    bytes_accessed = int(x_pad.size) * 2 + wb_bytes + b_pad * n_last_pad * 4
    cost = pl.CostEstimate(flops=flops, transcendentals=0,
                           bytes_accessed=bytes_accessed)
    cparams = pltpu.CompilerParams(
        dimension_semantics=("parallel",),      # shards across v7x's 2 TCs
        vmem_limit_bytes=int(budget),
    )

    def run(single_buffer_weights):
        return pl.pallas_call(
            _make_ffn_kernel(n_layers),
            out_shape=jax.ShapeDtypeStruct((b_pad, n_last_pad), x.dtype),
            grid=grid,
            in_specs=build_in_specs(single_buffer_weights),
            out_specs=out_specs,
            compiler_params=cparams,
            cost_estimate=cost,
        )(x_pad, *flat_wb)

    try:
        out = run(True)       # single-buffered resident weights
    except Exception:         # fallback if this jax rejects pipeline_mode
        out = run(False)

    # Slice off batch / feature padding outside the kernel.
    return out[:batch, :out_features]


class FeedForwardBlockPallas:
    """JAX/Pallas port of farm FeedForwardBlock: a stack of Linear layers."""

    def __init__(self, layer_dims, key, tile_b=None):
        self.layer_dims = list(layer_dims)
        self.output_size = layer_dims[-1]
        self.tile_b = tile_b

        n_layers = len(layer_dims) - 1
        keys = jax.random.split(key, n_layers)
        self.params = []  # unpadded fp32 (w [in, out], b [1, out]) — reference
        for i in range(n_layers):
            size_in, size_out = layer_dims[i], layer_dims[i + 1]
            wkey, bkey = jax.random.split(keys[i])
            # Deterministic init mimicking nn.Linear's U(-1/sqrt(in), 1/sqrt(in))
            bound = 1.0 / (size_in ** 0.5)
            w = jax.random.uniform(wkey, (size_in, size_out), jnp.float32,
                                   -bound, bound)
            b = jax.random.uniform(bkey, (1, size_out), jnp.float32,
                                   -bound, bound)
            self.params.append((w, b))

        # Pre-padded, pre-cast kernel operands (built once at init).
        self.padded_weights = []
        self.padded_biases = []
        for (w, b), size_in, size_out in zip(
                self.params, layer_dims[:-1], layer_dims[1:]):
            k_pad = _round_up(size_in, _LANE)
            n_pad = _round_up(size_out, _LANE)
            w_pad = (jnp.zeros((k_pad, n_pad), jnp.bfloat16)
                     .at[:size_in, :size_out].set(w.astype(jnp.bfloat16)))
            b_pad = (jnp.zeros((1, n_pad), jnp.float32)
                     .at[:, :size_out].set(b))
            self.padded_weights.append(w_pad)
            self.padded_biases.append(b_pad)

    def __call__(self, x, tile_b=None):
        return fused_ffn(x, self.padded_weights, self.padded_biases,
                         self.output_size,
                         tile_b=self.tile_b if tile_b is None else tile_b)


if __name__ == "__main__":
    key = jax.random.PRNGKey(0)
    k_x, k_params = jax.random.split(key)

    layer_dims = [32, 64, 16]   # variable-depth FFN: 32 -> 64 -> 16
    batch = 24
    x = jax.random.normal(k_x, (batch, layer_dims[0]), jnp.float32)

    model = FeedForwardBlockPallas(layer_dims, k_params)

    # Reference with matching numerics: bf16 MXU operands, fp32 accumulation,
    # fp32 bias add, bf16 recast between layers.
    h = x.astype(jnp.bfloat16)
    for li, (w, b) in enumerate(model.params):
        h = jnp.dot(h, w.astype(jnp.bfloat16),
                    preferred_element_type=jnp.float32) + b
        if li + 1 < len(model.params):
            h = h.astype(jnp.bfloat16)
    ref = h

    # 1) Auto-tiled path (whole batch in one VMEM-resident tile here).
    logits = model(x)
    jax.block_until_ready(logits)
    assert logits.shape == (batch, layer_dims[-1])
    assert logits.dtype == x.dtype
    assert jnp.allclose(logits, ref, atol=3e-3, rtol=3e-3), (
        float(jnp.max(jnp.abs(logits - ref))))

    # 2) Forced multi-step grid (tile_b=16 -> 2 batch tiles, tail padding)
    #    to exercise the tiled / resident-weight path for correctness.
    logits_tiled = model(x, tile_b=16)
    jax.block_until_ready(logits_tiled)
    assert jnp.allclose(logits_tiled, ref, atol=3e-3, rtol=3e-3), (
        float(jnp.max(jnp.abs(logits_tiled - ref))))

    print("KERNEL_OK")
</pallas_src>

<mosaic_0001>
module attributes {stable_mosaic.version = 11 : i64} {
  func.func @kernel(%arg0: i32, %arg1: memref<24x128xbf16, #tpu.memory_space<vmem>>, %arg2: memref<128x128xbf16, #tpu.memory_space<vmem>>, %arg3: memref<1x128xf32, #tpu.memory_space<vmem>>, %arg4: memref<128x128xbf16, #tpu.memory_space<vmem>>, %arg5: memref<1x128xf32, #tpu.memory_space<vmem>>, %arg6: memref<24x128xf32, #tpu.memory_space<vmem>>) attributes {dimension_semantics = [#tpu.dimension_semantics<parallel>], iteration_bounds = array<i64: 1>, scalar_prefetch = 0 : i64, scratch_operands = 0 : i64, tpu.core_type = #tpu.core_type<tc>, window_params = [{transform_indices = @transform_0, window_bounds = array<i64: 24, 128>}, {pipeline_mode = #tpu.pipeline_mode<synchronous>, transform_indices = @transform_1, window_bounds = array<i64: 128, 128>}, {pipeline_mode = #tpu.pipeline_mode<synchronous>, transform_indices = @transform_2, window_bounds = array<i64: 1, 128>}, {pipeline_mode = #tpu.pipeline_mode<synchronous>, transform_indices = @transform_3, window_bounds = array<i64: 128, 128>}, {pipeline_mode = #tpu.pipeline_mode<synchronous>, transform_indices = @transform_4, window_bounds = array<i64: 1, 128>}, {transform_indices = @transform_5, window_bounds = array<i64: 24, 128>}]} {
    %c0 = arith.constant 0 : index
    %c0_0 = arith.constant 0 : index
    %0 = vector.load %arg1[%c0, %c0_0] : memref<24x128xbf16, #tpu.memory_space<vmem>>, vector<24x128xbf16>
    %c0_1 = arith.constant 0 : index
    %c0_2 = arith.constant 0 : index
    %1 = vector.load %arg2[%c0_1, %c0_2] : memref<128x128xbf16, #tpu.memory_space<vmem>>, vector<128x128xbf16>
    %cst = arith.constant dense<0.000000e+00> : vector<24x128xf32>
    %2 = tpu.matmul %0, %1, %cst {dimension_numbers = #tpu.dot_dimension_numbers<[1], [0], [0], [1], [0, 0, 1, 1], [], []>} : vector<24x128xbf16>, vector<128x128xbf16>, vector<24x128xf32> -> vector<24x128xf32>
    %c0_3 = arith.constant 0 : index
    %c0_4 = arith.constant 0 : index
    %3 = vector.load %arg3[%c0_3, %c0_4] : memref<1x128xf32, #tpu.memory_space<vmem>>, vector<1x128xf32>
    %4 = vector.broadcast %3 : vector<1x128xf32> to vector<24x128xf32>
    %5 = arith.addf %2, %4 : vector<24x128xf32>
    %6 = arith.truncf %5 : vector<24x128xf32> to vector<24x128xbf16>
    %c0_5 = arith.constant 0 : index
    %c0_6 = arith.constant 0 : index
    %7 = vector.load %arg4[%c0_5, %c0_6] : memref<128x128xbf16, #tpu.memory_space<vmem>>, vector<128x128xbf16>
    %cst_7 = arith.constant dense<0.000000e+00> : vector<24x128xf32>
    %8 = tpu.matmul %6, %7, %cst_7 {dimension_numbers = #tpu.dot_dimension_numbers<[1], [0], [0], [1], [0, 0, 1, 1], [], []>} : vector<24x128xbf16>, vector<128x128xbf16>, vector<24x128xf32> -> vector<24x128xf32>
    %c0_8 = arith.constant 0 : index
    %c0_9 = arith.constant 0 : index
    %9 = vector.load %arg5[%c0_8, %c0_9] : memref<1x128xf32, #tpu.memory_space<vmem>>, vector<1x128xf32>
    %10 = vector.broadcast %9 : vector<1x128xf32> to vector<24x128xf32>
    %11 = arith.addf %8, %10 : vector<24x128xf32>
    %c0_10 = arith.constant 0 : index
    %c0_11 = arith.constant 0 : index
    %12 = vector.load %arg6[%c0_10, %c0_11] : memref<24x128xf32, #tpu.memory_space<vmem>>, vector<24x128xf32>
    tpu.vector_store %arg6[%c0_10, %c0_11], %11 {strides = array<i32>} : memref<24x128xf32, #tpu.memory_space<vmem>>, vector<24x128xf32>,
    return
  }
  func.func @transform_0(%arg0: i32) -> (i32, i32) {
    %c0_i32 = arith.constant 0 : i32
    %c0_i32_0 = arith.constant 0 : i32
    return %arg0, %c0_i32 : i32, i32
  }
  func.func @transform_1(%arg0: i32) -> (i32, i32) {
    %c0_i32 = arith.constant 0 : i32
    %c0_i32_0 = arith.constant 0 : i32
    %c0_i32_1 = arith.constant 0 : i32
    return %c0_i32, %c0_i32_0 : i32, i32
  }
  func.func @transform_2(%arg0: i32) -> (i32, i32) {
    %c0_i32 = arith.constant 0 : i32
    %c0_i32_0 = arith.constant 0 : i32
    %c0_i32_1 = arith.constant 0 : i32
    return %c0_i32, %c0_i32_0 : i32, i32
  }
  func.func @transform_3(%arg0: i32) -> (i32, i32) {
    %c0_i32 = arith.constant 0 : i32
    %c0_i32_0 = arith.constant 0 : i32
    %c0_i32_1 = arith.constant 0 : i32
    return %c0_i32, %c0_i32_0 : i32, i32
  }
  func.func @transform_4(%arg0: i32) -> (i32, i32) {
    %c0_i32 = arith.constant 0 : i32
    %c0_i32_0 = arith.constant 0 : i32
    %c0_i32_1 = arith.constant 0 : i32
    return %c0_i32, %c0_i32_0 : i32, i32
  }
  func.func @transform_5(%arg0: i32) -> (i32, i32) {
    %c0_i32 = arith.constant 0 : i32
    %c0_i32_0 = arith.constant 0 : i32
    return %arg0, %c0_i32 : i32, i32
  }
}

module attributes {stable_mosaic.version = 11 : i64} {
  func.func @kernel(%arg0: i32, %arg1: memref<24x128xbf16, #tpu.memory_space<vmem>>, %arg2: memref<128x128xbf16, #tpu.memory_space<vmem>>, %arg3: memref<1x128xf32, #tpu.memory_space<vmem>>, %arg4: memref<128x128xbf16, #tpu.memory_space<vmem>>, %arg5: memref<1x128xf32, #tpu.memory_space<vmem>>, %arg6: memref<24x128xf32, #tpu.memory_space<vmem>>) attributes {dimension_semantics = [#tpu.dimension_semantics<parallel>], iteration_bounds = array<i64: 1>, scalar_prefetch = 0 : i64, scratch_operands = 0 : i64, tpu.core_type = #tpu.core_type<tc>, window_params = [{transform_indices = @transform_0, window_bounds = array<i64: 24, 128>}, {pipeline_mode = #tpu.pipeline_mode<synchronous>, transform_indices = @transform_1, window_bounds = array<i64: 128, 128>}, {pipeline_mode = #tpu.pipeline_mode<synchronous>, transform_indices = @transform_2, window_bounds = array<i64: 1, 128>}, {pipeline_mode = #tpu.pipeline_mode<synchronous>, transform_indices = @transform_3, window_bounds = array<i64: 128, 128>}, {pipeline_mode = #tpu.pipeline_mode<synchronous>, transform_indices = @transform_4, window_bounds = array<i64: 1, 128>}, {transform_indices = @transform_5, window_bounds = array<i64: 24, 128>}]} {
    %c0 = arith.constant 0 : index
    %c0_0 = arith.constant 0 : index
    %0 = vector.load %arg1[%c0, %c0_0] : memref<24x128xbf16, #tpu.memory_space<vmem>>, vector<24x128xbf16>
    %c0_1 = arith.constant 0 : index
    %c0_2 = arith.constant 0 : index
    %1 = vector.load %arg2[%c0_1, %c0_2] : memref<128x128xbf16, #tpu.memory_space<vmem>>, vector<128x128xbf16>
    %cst = arith.constant dense<0.000000e+00> : vector<24x128xf32>
    %2 = tpu.matmul %0, %1, %cst {dimension_numbers = #tpu.dot_dimension_numbers<[1], [0], [0], [1], [0, 0, 1, 1], [], []>} : vector<24x128xbf16>, vector<128x128xbf16>, vector<24x128xf32> -> vector<24x128xf32>
    %c0_3 = arith.constant 0 : index
    %c0_4 = arith.constant 0 : index
    %3 = vector.load %arg3[%c0_3, %c0_4] : memref<1x128xf32, #tpu.memory_space<vmem>>, vector<1x128xf32>
    %4 = vector.broadcast %3 : vector<1x128xf32> to vector<24x128xf32>
    %5 = arith.addf %2, %4 : vector<24x128xf32>
    %6 = arith.truncf %5 : vector<24x128xf32> to vector<24x128xbf16>
    %c0_5 = arith.constant 0 : index
    %c0_6 = arith.constant 0 : index
    %7 = vector.load %arg4[%c0_5, %c0_6] : memref<128x128xbf16, #tpu.memory_space<vmem>>, vector<128x128xbf16>
    %cst_7 = arith.constant dense<0.000000e+00> : vector<24x128xf32>
    %8 = tpu.matmul %6, %7, %cst_7 {dimension_numbers = #tpu.dot_dimension_numbers<[1], [0], [0], [1], [0, 0, 1, 1], [], []>} : vector<24x128xbf16>, vector<128x128xbf16>, vector<24x128xf32> -> vector<24x128xf32>
    %c0_8 = arith.constant 0 : index
    %c0_9 = arith.constant 0 : index
    %9 = vector.load %arg5[%c0_8, %c0_9] : memref<1x128xf32, #tpu.memory_space<vmem>>, vector<1x128xf32>
    %10 = vector.broadcast %9 : vector<1x128xf32> to vector<24x128xf32>
    %11 = arith.addf %8, %10 : vector<24x128xf32>
    %c0_10 = arith.constant 0 : index
    %c0_11 = arith.constant 0 : index
    %12 = vector.load %arg6[%c0_10, %c0_11] : memref<24x128xf32, #tpu.memory_space<vmem>>, vector<24x128xf32>
    tpu.vector_store %arg6[%c0_10, %c0_11], %11 {strides = array<i32>} : memref<24x128xf32, #tpu.memory_space<vmem>>, vector<24x128xf32>,
    return
  }
  func.func @transform_0(%arg0: i32) -> (i32, i32) {
    %c0_i32 = arith.constant 0 : i32
    %c0_i32_0 = arith.constant 0 : i32
    return %arg0, %c0_i32 : i32, i32
  }
  func.func @transform_1(%arg0: i32) -> (i32, i32) {
    %c0_i32 = arith.constant 0 : i32
    %c0_i32_0 = arith.constant 0 : i32
    %c0_i32_1 = arith.constant 0 : i32
    return %c0_i32, %c0_i32_0 : i32, i32
  }
  func.func @transform_2(%arg0: i32) -> (i32, i32) {
    %c0_i32 = arith.constant 0 : i32
    %c0_i32_0 = arith.constant 0 : i32
    %c0_i32_1 = arith.constant 0 : i32
    return %c0_i32, %c0_i32_0 : i32, i32
  }
  func.func @transform_3(%arg0: i32) -> (i32, i32) {
    %c0_i32 = arith.constant 0 : i32
    %c0_i32_0 = arith.constant 0 : i32
    %c0_i32_1 = arith.constant 0 : i32
    return %c0_i32, %c0_i32_0 : i32, i32
  }
  func.func @transform_4(%arg0: i32) -> (i32, i32) {
    %c0_i32 = arith.constant 0 : i32
    %c0_i32_0 = arith.constant 0 : i32
    %c0_i32_1 = arith.constant 0 : i32
    return %c0_i32, %c0_i32_0 : i32, i32
  }
  func.func @transform_5(%arg0: i32) -> (i32, i32) {
    %c0_i32 = arith.constant 0 : i32
    %c0_i32_0 = arith.constant 0 : i32
    return %arg0, %c0_i32 : i32, i32
  }
}

</mosaic_0001>

<llo_original>
// kernel: tpu_custom_call.1
$region0: #{tpu_custom_call.1}
  #allocation0 [shape = 'u32[]', space=smem, size = 0x4, offset = 0x4, fixed_abs, tag = 'smem constant byte address 0x4 - core index']
  #allocation1 [shape = 'u32[144,128]{1,0:T(1,128)}', space=vmem, size = 0x12000, scoped, tag = 'internal scratch']
  %s0 = inlined_call_operand.hbm [shape: bf16[24,128], index: 0, kind: input, shape index: {}]
  %s1 = inlined_call_operand.hbm [shape: bf16[128,128], index: 1, kind: input, shape index: {}]
  %s2 = inlined_call_operand.vmem [shape: f32[1,128], index: 2, kind: input, shape index: {}]
  %s3 = inlined_call_operand.hbm [shape: bf16[128,128], index: 3, kind: input, shape index: {}]
  %s4 = inlined_call_operand.vmem [shape: f32[1,128], index: 4, kind: input, shape index: {}]
  %s5 = inlined_call_operand.hbm [shape: f32[24,128], index: 5, kind: output, shape index: {}]
  %s6 = sld [smem:[#allocation0]]
  $region42: #{tpu_custom_call.1} parent=0
    _
  %s8 = ssub.s32 1, %s6
  %s9 = scalar_select 0, %s8, %s6
  $region1: #{tpu_custom_call.1} parent=0
    #allocation2 [shape = 'u8[6144]{0}', space=vmem, size = 0x1800, scoped, tag = 'input window, operand 0, single buffered']
    #allocation3 [shape = 's32[1]{0}', space=sflag, size = 0x4, scoped, tag = 'scoped memory for tpu_custom_call.1']
    #allocation4 [shape = 's32[1]{0}', space=sflag, size = 0x4, scoped, tag = 'scoped memory for tpu_custom_call.1']
    #allocation5 [shape = 'u8[32768]{0}', space=vmem, size = 0x8000, scoped, tag = 'input window, operand 1, single buffered']
    #allocation6 [shape = 's32[1]{0}', space=sflag, size = 0x4, scoped, tag = 'scoped memory for tpu_custom_call.1']
    #allocation7 [shape = 'u8[32768]{0}', space=vmem, size = 0x8000, scoped, tag = 'input window, operand 3, single buffered']
    #allocation8 [shape = 'u8[12288]{0}', space=vmem, size = 0x3000, scoped, tag = 'output window, operand 0, single buffered']
    %10 = vsyncpa [#allocation3], 0
    %11 = vsyncpa [#allocation6], 0
    %12 = vsyncpa [#allocation4], 0
    // Predicated region
    $region2: #{tpu_custom_call.1} parent=1 // pred_check
      _
    $region3: #{tpu_custom_call.1} parent=1 // pred_check_branch
      %14 = sbr.rel (0) target = $region5
    $region4: #{tpu_custom_call.1} parent=1 // pred_region
      %s16 = ssub.s32 192, 192
      %17 = vsyncadd [#allocation3], %s16
      %s18 = sshll.u32 [#allocation2], 4
      %s19 = int_to_ptr.vmem [resolvable:$true] %s18
      %24 = dma.hbm_to_vmem [thread:$0]  %s0, 192, %s19, [#allocation3], 64, 64, 4
    $region5: #{tpu_custom_call.1} parent=1 // pred_fallthru
      _
    // Predicated region
    $region6: #{tpu_custom_call.1} parent=1 // pred_check
      _
    $region7: #{tpu_custom_call.1} parent=1 // pred_check_branch
      %26 = sbr.rel (0) target = $region9
    $region8: #{tpu_custom_call.1} parent=1 // pred_region
      %s28 = ssub.s32 1024, 1024
      %29 = vsyncadd [#allocation6], %s28
      %s30 = sshll.u32 [#allocation5], 4
      %s31 = int_to_ptr.vmem [resolvable:$true] %s30
      %36 = dma.hbm_to_vmem [thread:$0]  %s1, 1024, %s31, [#allocation6], 64, 64, 4
    $region9: #{tpu_custom_call.1} parent=1 // pred_fallthru
      _
    // Predicated region
    $region10: #{tpu_custom_call.1} parent=1 // pred_check
      _
    $region11: #{tpu_custom_call.1} parent=1 // pred_check_branch
      %38 = sbr.rel (0) target = $region13
    $region12: #{tpu_custom_call.1} parent=1 // pred_region
      _
    $region13: #{tpu_custom_call.1} parent=1 // pred_fallthru
      _
    // Predicated region
    $region14: #{tpu_custom_call.1} parent=1 // pred_check
      _
    $region15: #{tpu_custom_call.1} parent=1 // pred_check_branch
      %40 = sbr.rel (0) target = $region17
    $region16: #{tpu_custom_call.1} parent=1 // pred_region
      %s42 = ssub.s32 1024, 1024
      %43 = vsyncadd [#allocation6], %s42
      %s44 = sshll.u32 [#allocation7], 4
      %s45 = int_to_ptr.vmem [resolvable:$true] %s44
      %50 = dma.hbm_to_vmem [thread:$0]  %s3, 1024, %s45, [#allocation6], 64, 64, 4
    $region17: #{tpu_custom_call.1} parent=1 // pred_fallthru
      _
    // Predicated region
    $region18: #{tpu_custom_call.1} parent=1 // pred_check
      _
    $region19: #{tpu_custom_call.1} parent=1 // pred_check_branch
      %52 = sbr.rel (0) target = $region21
    $region20: #{tpu_custom_call.1} parent=1 // pred_region
      _
    $region21: #{tpu_custom_call.1} parent=1 // pred_fallthru
      _
    // Predicated region
    $region22: #{tpu_custom_call.1} parent=1 // pred_check
      _
    $region23: #{tpu_custom_call.1} parent=1 // pred_check_branch
      %54 = sbr.rel (0) target = $region25
    $region24: #{tpu_custom_call.1} parent=1 // pred_region
      %55 = dma.done [#allocation3], 192
    $region25: #{tpu_custom_call.1} parent=1 // pred_fallthru
      _
    // Predicated region
    $region26: #{tpu_custom_call.1} parent=1 // pred_check
      _
    $region27: #{tpu_custom_call.1} parent=1 // pred_check_branch
      %57 = sbr.rel (0) target = $region29
    $region28: #{tpu_custom_call.1} parent=1 // pred_region
      %58 = dma.done [#allocation6], 1024
    $region29: #{tpu_custom_call.1} parent=1 // pred_fallthru
      _
    // Predicated region
    $region30: #{tpu_custom_call.1} parent=1 // pred_check
      _
    $region31: #{tpu_custom_call.1} parent=1 // pred_check_branch
      %60 = sbr.rel (0) target = $region33
    $region32: #{tpu_custom_call.1} parent=1 // pred_region
      %61 = dma.done [#allocation6], 1024
    $region33: #{tpu_custom_call.1} parent=1 // pred_fallthru
      _
    %v63 = vld [vmem:[#allocation2] sm:$0xf]
    %v64 = vld [vmem:[#allocation2 + $0x4] sm:$0xf]
    %v65 = vld [vmem:[#allocation2 + $0x8] sm:$0xf]
    %v66 = vld [vmem:[#allocation5] sm:$0xf]
    %v67 = vld [vmem:[#allocation5 + $0x4] sm:$0xf]
    %v68 = vld [vmem:[#allocation5 + $0x8] sm:$0xf]
    %v69 = vld [vmem:[#allocation5 + $0xc] sm:$0xf]
    %v70 = vld [vmem:[#allocation5 + $0x10] sm:$0xf]
    %v71 = vld [vmem:[#allocation5 + $0x14] sm:$0xf]
    %v72 = vld [vmem:[#allocation5 + $0x18] sm:$0xf]
    %v73 = vld [vmem:[#allocation5 + $0x1c] sm:$0xf]
    %v74 = vld [vmem:[#allocation5 + $0x20] sm:$0xf]
    %v75 = vld [vmem:[#allocation5 + $0x24] sm:$0xf]
    %v76 = vld [vmem:[#allocation5 + $0x28] sm:$0xf]
    %v77 = vld [vmem:[#allocation5 + $0x2c] sm:$0xf]
    %v78 = vld [vmem:[#allocation5 + $0x30] sm:$0xf]
    %v79 = vld [vmem:[#allocation5 + $0x34] sm:$0xf]
    %v80 = vld [vmem:[#allocation5 + $0x38] sm:$0xf]
    %v81 = vld [vmem:[#allocation5 + $0x3c] sm:$0xf]
    %v82 = vld [vmem:[%s2] sm:$0x1]
    %v84 = vlaneseq
    %v85 = vshrl.u32 %v84, 7
    %v86 = vsub.s32 0, %v85
    %v87 = vrot.slane %v82, %v86
    %v92 = vunpack.c.l.b16 %v63
    %v93 = vunpack.c.l.b16 %v64
    %v94 = vunpack.c.l.b16 %v65
    %v95 = vpack.c.b16 %v93, %v92
    %v96 = vpack.c.b16 %v94, %v94
    %v115 = vunpack.c.l.b16 %v66
    %v116 = vunpack.c.l.b16 %v67
    %v117 = vunpack.c.l.b16 %v68
    %v118 = vunpack.c.l.b16 %v69
    %v119 = vunpack.c.l.b16 %v70
    %v120 = vunpack.c.l.b16 %v71
    %v121 = vunpack.c.l.b16 %v72
    %v122 = vunpack.c.l.b16 %v73
    %v123 = vunpack.c.l.b16 %v74
    %v124 = vunpack.c.l.b16 %v75
    %v125 = vunpack.c.l.b16 %v76
    %v126 = vunpack.c.l.b16 %v77
    %v127 = vunpack.c.l.b16 %v78
    %v128 = vunpack.c.l.b16 %v79
    %v129 = vunpack.c.l.b16 %v80
    %v130 = vunpack.c.l.b16 %v81
    %v131 = vpack.c.b16 %v116, %v115
    %v132 = vpack.c.b16 %v118, %v117
    %v133 = vpack.c.b16 %v120, %v119
    %v134 = vpack.c.b16 %v122, %v121
    %v135 = vpack.c.b16 %v124, %v123
    %v136 = vpack.c.b16 %v126, %v125
    %v137 = vpack.c.b16 %v128, %v127
    %v138 = vpack.c.b16 %v130, %v129
    %147 = vmatprep.subr.bf16.mxu0 0
    %148 = vmatpush1.bf16.msra.mxu0 %v131
    %149 = vmatprep.subr.bf16.mxu0 0
    %150 = vmatpush1.bf16.msra.mxu0 %v132
    %151 = vmatprep.subr.bf16.mxu0 0
    %152 = vmatpush1.bf16.msra.mxu0 %v133
    %153 = vmatprep.subr.bf16.mxu0 0
    %154 = vmatpush1.bf16.msra.mxu0 %v134
    %155 = vmatprep.subr.bf16.mxu0 0
    %156 = vmatpush1.bf16.msra.mxu0 %v135
    %157 = vmatprep.subr.bf16.mxu0 0
    %158 = vmatpush1.bf16.msra.mxu0 %v136
    %159 = vmatprep.subr.bf16.mxu0 0
    %160 = vmatpush1.bf16.msra.mxu0 %v137
    %161 = vmatprep.subr.bf16.mxu0 0
    %162 = vmatpush1.bf16.msra.mxu0 %v138
    %163 = vmatprep.subr.bf16.mxu0 0
    %164 = vmatpush1.bf16.msra.mxu0 0
    %165 = vmatprep.subr.bf16.mxu0 0
    %166 = vmatpush1.bf16.msra.mxu0 0
    %167 = vmatprep.subr.bf16.mxu0 0
    %168 = vmatpush1.bf16.msra.mxu0 0
    %169 = vmatprep.subr.bf16.mxu0 0
    %170 = vmatpush1.bf16.msra.mxu0 0
    %171 = vmatprep.subr.bf16.mxu0 0
    %172 = vmatpush1.bf16.msra.mxu0 0
    %173 = vmatprep.subr.bf16.mxu0 0
    %174 = vmatpush1.bf16.msra.mxu0 0
    %175 = vmatprep.subr.bf16.mxu0 0
    %176 = vmatpush1.bf16.msra.mxu0 0
    %177 = vmatprep.subr.bf16.mxu0 0
    %178 = vmatpush1.bf16.msra.mxu0 0
    %179 = vmatprep.mubr.bf16.mxu0 0
    %180 = vmatmul.mubr.bf16.gmra.mrb[0].mxu0 %v95
    %v181 = vpop.f32.mrb[0].mxu0
    %v182 = vadd.f32 %v87, %v181
    %v183 = vpop.f32.mrb[0].mxu0
    %v184 = vpop.f32.mrb[0].mxu0
    %v185 = vadd.f32 %v87, %v184
    %v186 = vpop.f32.mrb[0].mxu0
    %187 = vmatprep.mubr.bf16.mxu0 0
    %188 = vmatmul.mubr.bf16.gmra.mrb[0].mxu0 %v96
    %v189 = vpop.f32.mrb[0].mxu0
    %v190 = vadd.f32 %v87, %v189
    %v191 = vpop.f32.mrb[0].mxu0
    %v192 = vpop.f32.mrb[0].mxu0
    %v193 = vpop.f32.mrb[0].mxu0
    %194 = vdwg.mxu0
    %v195 = vpack.c.bf16 %v185, %v182
    %v196 = vpack.c.bf16 %v190, %v190
    %v197 = vld [vmem:[#allocation7] sm:$0xf]
    %v198 = vld [vmem:[#allocation7 + $0x4] sm:$0xf]
    %v199 = vld [vmem:[#allocation7 + $0x8] sm:$0xf]
    %v200 = vld [vmem:[#allocation7 + $0xc] sm:$0xf]
    %v201 = vld [vmem:[#allocation7 + $0x10] sm:$0xf]
    %v202 = vld [vmem:[#allocation7 + $0x14] sm:$0xf]
    %v203 = vld [vmem:[#allocation7 + $0x18] sm:$0xf]
    %v204 = vld [vmem:[#allocation7 + $0x1c] sm:$0xf]
    %v205 = vld [vmem:[#allocation7 + $0x20] sm:$0xf]
    %v206 = vld [vmem:[#allocation7 + $0x24] sm:$0xf]
    %v207 = vld [vmem:[#allocation7 + $0x28] sm:$0xf]
    %v208 = vld [vmem:[#allocation7 + $0x2c] sm:$0xf]
    %v209 = vld [vmem:[#allocation7 + $0x30] sm:$0xf]
    %v210 = vld [vmem:[#allocation7 + $0x34] sm:$0xf]
    %v211 = vld [vmem:[#allocation7 + $0x38] sm:$0xf]
    %v212 = vld [vmem:[#allocation7 + $0x3c] sm:$0xf]
    %v213 = vld [vmem:[%s4] sm:$0x1]
    %v215 = vlaneseq
    %v216 = vshrl.u32 %v215, 7
    %v217 = vsub.s32 0, %v216
    %v218 = vrot.slane %v213, %v217
    %v236 = vunpack.c.l.b16 %v197
    %v237 = vunpack.c.l.b16 %v198
    %v238 = vunpack.c.l.b16 %v199
    %v239 = vunpack.c.l.b16 %v200
    %v240 = vunpack.c.l.b16 %v201
    %v241 = vunpack.c.l.b16 %v202
    %v242 = vunpack.c.l.b16 %v203
    %v243 = vunpack.c.l.b16 %v204
    %v244 = vunpack.c.l.b16 %v205
    %v245 = vunpack.c.l.b16 %v206
    %v246 = vunpack.c.l.b16 %v207
    %v247 = vunpack.c.l.b16 %v208
    %v248 = vunpack.c.l.b16 %v209
    %v249 = vunpack.c.l.b16 %v210
    %v250 = vunpack.c.l.b16 %v211
    %v251 = vunpack.c.l.b16 %v212
    %v252 = vpack.c.b16 %v237, %v236
    %v253 = vpack.c.b16 %v239, %v238
    %v254 = vpack.c.b16 %v241, %v240
    %v255 = vpack.c.b16 %v243, %v242
    %v256 = vpack.c.b16 %v245, %v244
    %v257 = vpack.c.b16 %v247, %v246
    %v258 = vpack.c.b16 %v249, %v248
    %v259 = vpack.c.b16 %v251, %v250
    %268 = vmatprep.subr.bf16.mxu0 0
    %269 = vmatpush1.bf16.msra.mxu0 %v252
    %270 = vmatprep.subr.bf16.mxu0 0
    %271 = vmatpush1.bf16.msra.mxu0 %v253
    %272 = vmatprep.subr.bf16.mxu0 0
    %273 = vmatpush1.bf16.msra.mxu0 %v254
    %274 = vmatprep.subr.bf16.mxu0 0
    %275 = vmatpush1.bf16.msra.mxu0 %v255
    %276 = vmatprep.subr.bf16.mxu0 0
    %277 = vmatpush1.bf16.msra.mxu0 %v256
    %278 = vmatprep.subr.bf16.mxu0 0
    %279 = vmatpush1.bf16.msra.mxu0 %v257
    %280 = vmatprep.subr.bf16.mxu0 0
    %281 = vmatpush1.bf16.msra.mxu0 %v258
    %282 = vmatprep.subr.bf16.mxu0 0
    %283 = vmatpush1.bf16.msra.mxu0 %v259
    %284 = vmatprep.subr.bf16.mxu0 0
    %285 = vmatpush1.bf16.msra.mxu0 0
    %286 = vmatprep.subr.bf16.mxu0 0
    %287 = vmatpush1.bf16.msra.mxu0 0
    %288 = vmatprep.subr.bf16.mxu0 0
    %289 = vmatpush1.bf16.msra.mxu0 0
    %290 = vmatprep.subr.bf16.mxu0 0
    %291 = vmatpush1.bf16.msra.mxu0 0
    %292 = vmatprep.subr.bf16.mxu0 0
    %293 = vmatpush1.bf16.msra.mxu0 0
    %294 = vmatprep.subr.bf16.mxu0 0
    %295 = vmatpush1.bf16.msra.mxu0 0
    %296 = vmatprep.subr.bf16.mxu0 0
    %297 = vmatpush1.bf16.msra.mxu0 0
    %298 = vmatprep.subr.bf16.mxu0 0
    %299 = vmatpush1.bf16.msra.mxu0 0
    %300 = vmatprep.mubr.bf16.mxu0 0
    %301 = vmatmul.mubr.bf16.gmra.mrb[0].mxu0 %v195
    %v302 = vpop.f32.mrb[0].mxu0
    %v303 = vadd.f32 %v218, %v302
    %v304 = vpop.f32.mrb[0].mxu0
    %v305 = vpop.f32.mrb[0].mxu0
    %v306 = vadd.f32 %v218, %v305
    %v307 = vpop.f32.mrb[0].mxu0
    %308 = vmatprep.mubr.bf16.mxu0 0
    %309 = vmatmul.mubr.bf16.gmra.mrb[0].mxu0 %v196
    %v310 = vpop.f32.mrb[0].mxu0
    %v311 = vadd.f32 %v218, %v310
    %v312 = vpop.f32.mrb[0].mxu0
    %v313 = vpop.f32.mrb[0].mxu0
    %v314 = vpop.f32.mrb[0].mxu0
    %315 = vdwg.mxu0
    %316 = vst [vmem:[#allocation8] sm:$0xff] %v303
    %317 = vst [vmem:[#allocation8 + $0x8] sm:$0xff] %v306
    %318 = vst [vmem:[#allocation8 + $0x10] sm:$0xff] %v311
    // Predicated region
    $region34: #{tpu_custom_call.1} parent=1 // pred_check
      _
    $region35: #{tpu_custom_call.1} parent=1 // pred_check_branch
      %320 = sbr.rel (0) target = $region37
    $region36: #{tpu_custom_call.1} parent=1 // pred_region
      %s322 = ssub.s32 384, 384
      %323 = vsyncadd [#allocation4], %s322
      %s324 = sshll.u32 [#allocation8], 4
      %s325 = int_to_ptr.vmem [resolvable:$true] %s324
      %330 = dma.vmem_to_hbm [thread:$0]  %s325, 384, %s5, [#allocation4], 128, 128, 8
    $region37: #{tpu_custom_call.1} parent=1 // pred_fallthru
      _
    // Predicated region
    $region38: #{tpu_custom_call.1} parent=1 // pred_check
      _
    $region39: #{tpu_custom_call.1} parent=1 // pred_check_branch
      %332 = sbr.rel (0) target = $region41
    $region40: #{tpu_custom_call.1} parent=1 // pred_region
      %333 = dma.done [#allocation4], 384
    $region41: #{tpu_custom_call.1} parent=1 // pred_fallthru
      _
    %334 = vsyncpa [#allocation3], 1
    %335 = vsyncpa [#allocation6], 1
    %336 = vsyncpa [#allocation4], 1

// kernel: tpu_custom_call.1
$region0: #{tpu_custom_call.1}
  #allocation0 [shape = 'u32[]', space=smem, size = 0x4, offset = 0x4, fixed_abs, tag = 'smem constant byte address 0x4 - core index']
  #allocation1 [shape = 'u32[144,128]{1,0:T(1,128)}', space=vmem, size = 0x12000, scoped, tag = 'internal scratch']
  %s0 = inlined_call_operand.hbm [shape: bf16[24,128], index: 0, kind: input, shape index: {}]
  %s1 = inlined_call_operand.hbm [shape: bf16[128,128], index: 1, kind: input, shape index: {}]
  %s2 = inlined_call_operand.vmem [shape: f32[1,128], index: 2, kind: input, shape index: {}]
  %s3 = inlined_call_operand.hbm [shape: bf16[128,128], index: 3, kind: input, shape index: {}]
  %s4 = inlined_call_operand.vmem [shape: f32[1,128], index: 4, kind: input, shape index: {}]
  %s5 = inlined_call_operand.hbm [shape: f32[24,128], index: 5, kind: output, shape index: {}]
  %s6 = sld [smem:[#allocation0]]
  $region42: #{tpu_custom_call.1} parent=0
    _
  %s8 = ssub.s32 1, %s6
  %s9 = scalar_select 0, %s8, %s6
  $region1: #{tpu_custom_call.1} parent=0
    #allocation2 [shape = 'u8[6144]{0}', space=vmem, size = 0x1800, scoped, tag = 'input window, operand 0, single buffered']
    #allocation3 [shape = 's32[1]{0}', space=sflag, size = 0x4, scoped, tag = 'scoped memory for tpu_custom_call.1']
    #allocation4 [shape = 's32[1]{0}', space=sflag, size = 0x4, scoped, tag = 'scoped memory for tpu_custom_call.1']
    #allocation5 [shape = 'u8[32768]{0}', space=vmem, size = 0x8000, scoped, tag = 'input window, operand 1, single buffered']
    #allocation6 [shape = 's32[1]{0}', space=sflag, size = 0x4, scoped, tag = 'scoped memory for tpu_custom_call.1']
    #allocation7 [shape = 'u8[32768]{0}', space=vmem, size = 0x8000, scoped, tag = 'input window, operand 3, single buffered']
    #allocation8 [shape = 'u8[12288]{0}', space=vmem, size = 0x3000, scoped, tag = 'output window, operand 0, single buffered']
    %10 = vsyncpa [#allocation3], 0
    %11 = vsyncpa [#allocation6], 0
    %12 = vsyncpa [#allocation4], 0
    // Predicated region
    $region2: #{tpu_custom_call.1} parent=1 // pred_check
      _
    $region3: #{tpu_custom_call.1} parent=1 // pred_check_branch
      %14 = sbr.rel (0) target = $region5
    $region4: #{tpu_custom_call.1} parent=1 // pred_region
      %s16 = ssub.s32 192, 192
      %17 = vsyncadd [#allocation3], %s16
      %s18 = sshll.u32 [#allocation2], 4
      %s19 = int_to_ptr.vmem [resolvable:$true] %s18
      %24 = dma.hbm_to_vmem [thread:$0]  %s0, 192, %s19, [#allocation3], 64, 64, 4
    $region5: #{tpu_custom_call.1} parent=1 // pred_fallthru
      _
    // Predicated region
    $region6: #{tpu_custom_call.1} parent=1 // pred_check
      _
    $region7: #{tpu_custom_call.1} parent=1 // pred_check_branch
      %26 = sbr.rel (0) target = $region9
    $region8: #{tpu_custom_call.1} parent=1 // pred_region
      %s28 = ssub.s32 1024, 1024
      %29 = vsyncadd [#allocation6], %s28
      %s30 = sshll.u32 [#allocation5], 4
      %s31 = int_to_ptr.vmem [resolvable:$true] %s30
      %36 = dma.hbm_to_vmem [thread:$0]  %s1, 1024, %s31, [#allocation6], 64, 64, 4
    $region9: #{tpu_custom_call.1} parent=1 // pred_fallthru
      _
    // Predicated region
    $region10: #{tpu_custom_call.1} parent=1 // pred_check
      _
    $region11: #{tpu_custom_call.1} parent=1 // pred_check_branch
      %38 = sbr.rel (0) target = $region13
    $region12: #{tpu_custom_call.1} parent=1 // pred_region
      _
    $region13: #{tpu_custom_call.1} parent=1 // pred_fallthru
      _
    // Predicated region
    $region14: #{tpu_custom_call.1} parent=1 // pred_check
      _
    $region15: #{tpu_custom_call.1} parent=1 // pred_check_branch
      %40 = sbr.rel (0) target = $region17
    $region16: #{tpu_custom_call.1} parent=1 // pred_region
      %s42 = ssub.s32 1024, 1024
      %43 = vsyncadd [#allocation6], %s42
      %s44 = sshll.u32 [#allocation7], 4
      %s45 = int_to_ptr.vmem [resolvable:$true] %s44
      %50 = dma.hbm_to_vmem [thread:$0]  %s3, 1024, %s45, [#allocation6], 64, 64, 4
    $region17: #{tpu_custom_call.1} parent=1 // pred_fallthru
      _
    // Predicated region
    $region18: #{tpu_custom_call.1} parent=1 // pred_check
      _
    $region19: #{tpu_custom_call.1} parent=1 // pred_check_branch
      %52 = sbr.rel (0) target = $region21
    $region20: #{tpu_custom_call.1} parent=1 // pred_region
      _
    $region21: #{tpu_custom_call.1} parent=1 // pred_fallthru
      _
    // Predicated region
    $region22: #{tpu_custom_call.1} parent=1 // pred_check
      _
    $region23: #{tpu_custom_call.1} parent=1 // pred_check_branch
      %54 = sbr.rel (0) target = $region25
    $region24: #{tpu_custom_call.1} parent=1 // pred_region
      %55 = dma.done [#allocation3], 192
    $region25: #{tpu_custom_call.1} parent=1 // pred_fallthru
      _
    // Predicated region
    $region26: #{tpu_custom_call.1} parent=1 // pred_check
      _
    $region27: #{tpu_custom_call.1} parent=1 // pred_check_branch
      %57 = sbr.rel (0) target = $region29
    $region28: #{tpu_custom_call.1} parent=1 // pred_region
      %58 = dma.done [#allocation6], 1024
    $region29: #{tpu_custom_call.1} parent=1 // pred_fallthru
      _
    // Predicated region
    $region30: #{tpu_custom_call.1} parent=1 // pred_check
      _
    $region31: #{tpu_custom_call.1} parent=1 // pred_check_branch
      %60 = sbr.rel (0) target = $region33
    $region32: #{tpu_custom_call.1} parent=1 // pred_region
      %61 = dma.done [#allocation6], 1024
    $region33: #{tpu_custom_call.1} parent=1 // pred_fallthru
      _
    %v63 = vld [vmem:[#allocation2] sm:$0xf]
    %v64 = vld [vmem:[#allocation2 + $0x4] sm:$0xf]
    %v65 = vld [vmem:[#allocation2 + $0x8] sm:$0xf]
    %v66 = vld [vmem:[#allocation5] sm:$0xf]
    %v67 = vld [vmem:[#allocation5 + $0x4] sm:$0xf]
    %v68 = vld [vmem:[#allocation5 + $0x8] sm:$0xf]
    %v69 = vld [vmem:[#allocation5 + $0xc] sm:$0xf]
    %v70 = vld [vmem:[#allocation5 + $0x10] sm:$0xf]
    %v71 = vld [vmem:[#allocation5 + $0x14] sm:$0xf]
    %v72 = vld [vmem:[#allocation5 + $0x18] sm:$0xf]
    %v73 = vld [vmem:[#allocation5 + $0x1c] sm:$0xf]
    %v74 = vld [vmem:[#allocation5 + $0x20] sm:$0xf]
    %v75 = vld [vmem:[#allocation5 + $0x24] sm:$0xf]
    %v76 = vld [vmem:[#allocation5 + $0x28] sm:$0xf]
    %v77 = vld [vmem:[#allocation5 + $0x2c] sm:$0xf]
    %v78 = vld [vmem:[#allocation5 + $0x30] sm:$0xf]
    %v79 = vld [vmem:[#allocation5 + $0x34] sm:$0xf]
    %v80 = vld [vmem:[#allocation5 + $0x38] sm:$0xf]
    %v81 = vld [vmem:[#allocation5 + $0x3c] sm:$0xf]
    %v82 = vld [vmem:[%s2] sm:$0x1]
    %v84 = vlaneseq
    %v85 = vshrl.u32 %v84, 7
    %v86 = vsub.s32 0, %v85
    %v87 = vrot.slane %v82, %v86
    %v92 = vunpack.c.l.b16 %v63
    %v93 = vunpack.c.l.b16 %v64
    %v94 = vunpack.c.l.b16 %v65
    %v95 = vpack.c.b16 %v93, %v92
    %v96 = vpack.c.b16 %v94, %v94
    %v115 = vunpack.c.l.b16 %v66
    %v116 = vunpack.c.l.b16 %v67
    %v117 = vunpack.c.l.b16 %v68
    %v118 = vunpack.c.l.b16 %v69
    %v119 = vunpack.c.l.b16 %v70
    %v120 = vunpack.c.l.b16 %v71
    %v121 = vunpack.c.l.b16 %v72
    %v122 = vunpack.c.l.b16 %v73
    %v123 = vunpack.c.l.b16 %v74
    %v124 = vunpack.c.l.b16 %v75
    %v125 = vunpack.c.l.b16 %v76
    %v126 = vunpack.c.l.b16 %v77
    %v127 = vunpack.c.l.b16 %v78
    %v128 = vunpack.c.l.b16 %v79
    %v129 = vunpack.c.l.b16 %v80
    %v130 = vunpack.c.l.b16 %v81
    %v131 = vpack.c.b16 %v116, %v115
    %v132 = vpack.c.b16 %v118, %v117
    %v133 = vpack.c.b16 %v120, %v119
    %v134 = vpack.c.b16 %v122, %v121
    %v135 = vpack.c.b16 %v124, %v123
    %v136 = vpack.c.b16 %v126, %v125
    %v137 = vpack.c.b16 %v128, %v127
    %v138 = vpack.c.b16 %v130, %v129
    %147 = vmatprep.subr.bf16.mxu0 0
    %148 = vmatpush1.bf16.msra.mxu0 %v131
    %149 = vmatprep.subr.bf16.mxu0 0
    %150 = vmatpush1.bf16.msra.mxu0 %v132
    %151 = vmatprep.subr.bf16.mxu0 0
    %152 = vmatpush1.bf16.msra.mxu0 %v133
    %153 = vmatprep.subr.bf16.mxu0 0
    %154 = vmatpush1.bf16.msra.mxu0 %v134
    %155 = vmatprep.subr.bf16.mxu0 0
    %156 = vmatpush1.bf16.msra.mxu0 %v135
    %157 = vmatprep.subr.bf16.mxu0 0
    %158 = vmatpush1.bf16.msra.mxu0 %v136
    %159 = vmatprep.subr.bf16.mxu0 0
    %160 = vmatpush1.bf16.msra.mxu0 %v137
    %161 = vmatprep.subr.bf16.mxu0 0
    %162 = vmatpush1.bf16.msra.mxu0 %v138
    %163 = vmatprep.subr.bf16.mxu0 0
    %164 = vmatpush1.bf16.msra.mxu0 0
    %165 = vmatprep.subr.bf16.mxu0 0
    %166 = vmatpush1.bf16.msra.mxu0 0
    %167 = vmatprep.subr.bf16.mxu0 0
    %168 = vmatpush1.bf16.msra.mxu0 0
    %169 = vmatprep.subr.bf16.mxu0 0
    %170 = vmatpush1.bf16.msra.mxu0 0
    %171 = vmatprep.subr.bf16.mxu0 0
    %172 = vmatpush1.bf16.msra.mxu0 0
    %173 = vmatprep.subr.bf16.mxu0 0
    %174 = vmatpush1.bf16.msra.mxu0 0
    %175 = vmatprep.subr.bf16.mxu0 0
    %176 = vmatpush1.bf16.msra.mxu0 0
    %177 = vmatprep.subr.bf16.mxu0 0
    %178 = vmatpush1.bf16.msra.mxu0 0
    %179 = vmatprep.mubr.bf16.mxu0 0
    %180 = vmatmul.mubr.bf16.gmra.mrb[0].mxu0 %v95
    %v181 = vpop.f32.mrb[0].mxu0
    %v182 = vadd.f32 %v87, %v181
    %v183 = vpop.f32.mrb[0].mxu0
    %v184 = vpop.f32.mrb[0].mxu0
    %v185 = vadd.f32 %v87, %v184
    %v186 = vpop.f32.mrb[0].mxu0
    %187 = vmatprep.mubr.bf16.mxu0 0
    %188 = vmatmul.mubr.bf16.gmra.mrb[0].mxu0 %v96
    %v189 = vpop.f32.mrb[0].mxu0
    %v190 = vadd.f32 %v87, %v189
    %v191 = vpop.f32.mrb[0].mxu0
    %v192 = vpop.f32.mrb[0].mxu0
    %v193 = vpop.f32.mrb[0].mxu0
    %194 = vdwg.mxu0
    %v195 = vpack.c.bf16 %v185, %v182
    %v196 = vpack.c.bf16 %v190, %v190
    %v197 = vld [vmem:[#allocation7] sm:$0xf]
    %v198 = vld [vmem:[#allocation7 + $0x4] sm:$0xf]
    %v199 = vld [vmem:[#allocation7 + $0x8] sm:$0xf]
    %v200 = vld [vmem:[#allocation7 + $0xc] sm:$0xf]
    %v201 = vld [vmem:[#allocation7 + $0x10] sm:$0xf]
    %v202 = vld [vmem:[#allocation7 + $0x14] sm:$0xf]
    %v203 = vld [vmem:[#allocation7 + $0x18] sm:$0xf]
    %v204 = vld [vmem:[#allocation7 + $0x1c] sm:$0xf]
    %v205 = vld [vmem:[#allocation7 + $0x20] sm:$0xf]
    %v206 = vld [vmem:[#allocation7 + $0x24] sm:$0xf]
    %v207 = vld [vmem:[#allocation7 + $0x28] sm:$0xf]
    %v208 = vld [vmem:[#allocation7 + $0x2c] sm:$0xf]
    %v209 = vld [vmem:[#allocation7 + $0x30] sm:$0xf]
    %v210 = vld [vmem:[#allocation7 + $0x34] sm:$0xf]
    %v211 = vld [vmem:[#allocation7 + $0x38] sm:$0xf]
    %v212 = vld [vmem:[#allocation7 + $0x3c] sm:$0xf]
    %v213 = vld [vmem:[%s4] sm:$0x1]
    %v215 = vlaneseq
    %v216 = vshrl.u32 %v215, 7
    %v217 = vsub.s32 0, %v216
    %v218 = vrot.slane %v213, %v217
    %v236 = vunpack.c.l.b16 %v197
    %v237 = vunpack.c.l.b16 %v198
    %v238 = vunpack.c.l.b16 %v199
    %v239 = vunpack.c.l.b16 %v200
    %v240 = vunpack.c.l.b16 %v201
    %v241 = vunpack.c.l.b16 %v202
    %v242 = vunpack.c.l.b16 %v203
    %v243 = vunpack.c.l.b16 %v204
    %v244 = vunpack.c.l.b16 %v205
    %v245 = vunpack.c.l.b16 %v206
    %v246 = vunpack.c.l.b16 %v207
    %v247 = vunpack.c.l.b16 %v208
    %v248 = vunpack.c.l.b16 %v209
    %v249 = vunpack.c.l.b16 %v210
    %v250 = vunpack.c.l.b16 %v211
    %v251 = vunpack.c.l.b16 %v212
    %v252 = vpack.c.b16 %v237, %v236
    %v253 = vpack.c.b16 %v239, %v238
    %v254 = vpack.c.b16 %v241, %v240
    %v255 = vpack.c.b16 %v243, %v242
    %v256 = vpack.c.b16 %v245, %v244
    %v257 = vpack.c.b16 %v247, %v246
    %v258 = vpack.c.b16 %v249, %v248
    %v259 = vpack.c.b16 %v251, %v250
    %268 = vmatprep.subr.bf16.mxu0 0
    %269 = vmatpush1.bf16.msra.mxu0 %v252
    %270 = vmatprep.subr.bf16.mxu0 0
    %271 = vmatpush1.bf16.msra.mxu0 %v253
    %272 = vmatprep.subr.bf16.mxu0 0
    %273 = vmatpush1.bf16.msra.mxu0 %v254
    %274 = vmatprep.subr.bf16.mxu0 0
    %275 = vmatpush1.bf16.msra.mxu0 %v255
    %276 = vmatprep.subr.bf16.mxu0 0
    %277 = vmatpush1.bf16.msra.mxu0 %v256
    %278 = vmatprep.subr.bf16.mxu0 0
    %279 = vmatpush1.bf16.msra.mxu0 %v257
    %280 = vmatprep.subr.bf16.mxu0 0
    %281 = vmatpush1.bf16.msra.mxu0 %v258
    %282 = vmatprep.subr.bf16.mxu0 0
    %283 = vmatpush1.bf16.msra.mxu0 %v259
    %284 = vmatprep.subr.bf16.mxu0 0
    %285 = vmatpush1.bf16.msra.mxu0 0
    %286 = vmatprep.subr.bf16.mxu0 0
    %287 = vmatpush1.bf16.msra.mxu0 0
    %288 = vmatprep.subr.bf16.mxu0 0
    %289 = vmatpush1.bf16.msra.mxu0 0
    %290 = vmatprep.subr.bf16.mxu0 0
    %291 = vmatpush1.bf16.msra.mxu0 0
    %292 = vmatprep.subr.bf16.mxu0 0
    %293 = vmatpush1.bf16.msra.mxu0 0
    %294 = vmatprep.subr.bf16.mxu0 0
    %295 = vmatpush1.bf16.msra.mxu0 0
    %296 = vmatprep.subr.bf16.mxu0 0
    %297 = vmatpush1.bf16.msra.mxu0 0
    %298 = vmatprep.subr.bf16.mxu0 0
    %299 = vmatpush1.bf16.msra.mxu0 0
    %300 = vmatprep.mubr.bf16.mxu0 0
    %301 = vmatmul.mubr.bf16.gmra.mrb[0].mxu0 %v195
    %v302 = vpop.f32.mrb[0].mxu0
    %v303 = vadd.f32 %v218, %v302
    %v304 = vpop.f32.mrb[0].mxu0
    %v305 = vpop.f32.mrb[0].mxu0
    %v306 = vadd.f32 %v218, %v305
    %v307 = vpop.f32.mrb[0].mxu0
    %308 = vmatprep.mubr.bf16.mxu0 0
    %309 = vmatmul.mubr.bf16.gmra.mrb[0].mxu0 %v196
    %v310 = vpop.f32.mrb[0].mxu0
    %v311 = vadd.f32 %v218, %v310
    %v312 = vpop.f32.mrb[0].mxu0
    %v313 = vpop.f32.mrb[0].mxu0
    %v314 = vpop.f32.mrb[0].mxu0
    %315 = vdwg.mxu0
    %316 = vst [vmem:[#allocation8] sm:$0xff] %v303
    %317 = vst [vmem:[#allocation8 + $0x8] sm:$0xff] %v306
    %318 = vst [vmem:[#allocation8 + $0x10] sm:$0xff] %v311
    // Predicated region
    $region34: #{tpu_custom_call.1} parent=1 // pred_check
      _
    $region35: #{tpu_custom_call.1} parent=1 // pred_check_branch
      %320 = sbr.rel (0) target = $region37
    $region36: #{tpu_custom_call.1} parent=1 // pred_region
      %s322 = ssub.s32 384, 384
      %323 = vsyncadd [#allocation4], %s322
      %s324 = sshll.u32 [#allocation8], 4
      %s325 = int_to_ptr.vmem [resolvable:$true] %s324
      %330 = dma.vmem_to_hbm [thread:$0]  %s325, 384, %s5, [#allocation4], 128, 128, 8
    $region37: #{tpu_custom_call.1} parent=1 // pred_fallthru
      _
    // Predicated region
    $region38: #{tpu_custom_call.1} parent=1 // pred_check
      _
    $region39: #{tpu_custom_call.1} parent=1 // pred_check_branch
      %332 = sbr.rel (0) target = $region41
    $region40: #{tpu_custom_call.1} parent=1 // pred_region
      %333 = dma.done [#allocation4], 384
    $region41: #{tpu_custom_call.1} parent=1 // pred_fallthru
      _
    %334 = vsyncpa [#allocation3], 1
    %335 = vsyncpa [#allocation6], 1
    %336 = vsyncpa [#allocation4], 1

</llo_original>
